<compile_context>
chip_gen: v6e
topology: v6e:2x2x1
jax: 0.10.0
libtpu: 0.0.40
codegen_flags: <defaults>
</compile_context>

<pallas_src>
import jax
import jax.numpy as jnp
from jax.experimental import pallas as pl
from jax.experimental.pallas import tpu as pltpu


# ---------------------------------------------------------------------------
# Kernel
# ---------------------------------------------------------------------------
def _classifier_kernel(x_ref, w1_ref, b1_ref, w2_ref, b2_ref, o_ref):
    # x_ref:  [TM, E]        (one row-tile of the flattened input, E = embed_dim)
    # w1_ref: [E, H_pad]     b1_ref: [1, H_pad]      (VMEM-resident across grid)
    # w2_ref: [H_pad, T]     b2_ref: [1, T]          (T = target_size)
    # o_ref:  [TM, T]
    w1 = w1_ref[...]
    x = x_ref[...].astype(w1.dtype)              # in-kernel cast (bf16 path); no HBM copy
    # top linear (MXU, f32 accumulate) + bias + ReLU (VPU, f32)
    h = jnp.dot(x, w1, preferred_element_type=jnp.float32)
    h = jnp.maximum(h + b1_ref[...], 0.0)
    # bottom linear (MXU, f32 accumulate) + bias
    w2 = w2_ref[...]
    logit = jnp.dot(h.astype(w2.dtype), w2, preferred_element_type=jnp.float32)
    o_ref[...] = (logit + b2_ref[...]).astype(o_ref.dtype)


# ---------------------------------------------------------------------------
# Wrapper helpers
# ---------------------------------------------------------------------------
def _round_up(x, n):
    return ((x + n - 1) // n) * n


def _vmem_plan():
    """(vmem_limit_bytes for CompilerParams, planning budget for tile selection)."""
    try:
        cap = int(pltpu.get_tpu_info().vmem_capacity_bytes)
    except Exception:
        cap = 64 << 20  # conservative fallback = v7x per-core capacity
    # Request ~75% of physical VMEM (capped at 100 MiB) and plan against that
    # minus headroom for Mosaic internal scratch.
    vmem_limit = min(int(cap * 3 // 4), 100 << 20)
    budget = max(vmem_limit - (4 << 20), 8 << 20)
    return vmem_limit, budget


def _select_row_tile(m, embed_dim, h_pad, t_cols, in_bytes, w_bytes, out_bytes,
                     budget_bytes):
    """Largest 128-multiple row tile such that
         resident weights (x2, double-buffer worst case)
       + double-buffered activation/output tiles
       + in-kernel f32 temporaries (x cast, h, logits)
       fit the planning budget."""
    resident = 2 * ((embed_dim * h_pad + h_pad * t_cols) * w_bytes
                    + (h_pad + t_cols) * 4)
    per_row = (2 * embed_dim * in_bytes              # double-buffered input tile
               + 2 * t_cols * out_bytes              # double-buffered output tile
               + (embed_dim + h_pad + t_cols) * 4)   # f32 temporaries per row
    avail = budget_bytes - resident
    if avail < per_row * 128:
        # TODO(synk): K/N-tiled fallback once resident weights overflow VMEM.
        tm = 128
    else:
        tm = (avail // per_row) // 128 * 128
    tm = min(tm, 4096)
    # Keep >= 4 grid steps on large problems: megacore sharding on v7x plus
    # DMA/compute pipelining on all generations.
    tm = min(tm, max(128, _round_up(pl.cdiv(m, 4), 128)))
    # Never exceed the (8-row padded) problem itself.
    tm = min(tm, _round_up(max(m, 1), 8))
    return int(tm)


def prepare_classifier_params(w_top, b_top, w_bottom, b_bottom, param_dtype=None):
    """One-time prep: transpose to [in, out] and pad only the hidden (lane) dim.

    PyTorch convention in: w_top [hidden_dim, embed_dim], b_top [hidden_dim],
                           w_bottom [target_size, hidden_dim], b_bottom [target_size].
    Optionally cast weights to a narrow matmul dtype (e.g. jnp.bfloat16).
    """
    hidden_dim, embed_dim = w_top.shape
    target_size = w_bottom.shape[0]
    h_pad = _round_up(hidden_dim, 128)
    dt = param_dtype if param_dtype is not None else w_top.dtype

    # w1: [embed_dim, h_pad] — zero-padded columns are inert; sublane dim stays
    # the full embed_dim so the activation tile needs no lane padding.
    w1 = jnp.zeros((embed_dim, h_pad), dt).at[:, :hidden_dim].set(w_top.T.astype(dt))
    # w2: [h_pad, target_size] — zero-padded rows multiply the zero columns of h.
    w2 = jnp.zeros((h_pad, target_size), dt).at[:hidden_dim, :].set(w_bottom.T.astype(dt))
    b1 = jnp.zeros((1, h_pad), jnp.float32).at[:, :hidden_dim].set(
        b_top.astype(jnp.float32))
    b2 = b_bottom.astype(jnp.float32).reshape(1, target_size)

    return dict(w1=w1, b1=b1, w2=w2, b2=b2,
                embed_dim=embed_dim, hidden_dim=hidden_dim, target_size=target_size)


def classifier_forward(hidden, params):
    """hidden: [..., embed_dim]; params from prepare_classifier_params()."""
    w1, b1, w2, b2 = params["w1"], params["b1"], params["w2"], params["b2"]
    embed_dim = params["embed_dim"]
    target_size = params["target_size"]
    h_pad = w1.shape[1]

    lead_shape = hidden.shape[:-1]
    x2d = hidden.reshape(-1, embed_dim)               # [M, E] (view, no copy)
    m = x2d.shape[0]

    in_bytes = jnp.dtype(hidden.dtype).itemsize
    w_bytes = jnp.dtype(w1.dtype).itemsize
    out_bytes = in_bytes

    vmem_limit, budget = _vmem_plan()
    tm = _select_row_tile(m, embed_dim, h_pad, target_size,
                          in_bytes, w_bytes, out_bytes, budget)
    grid = (pl.cdiv(m, tm),)                          # tail row block masked by Pallas

    weight_bytes = (embed_dim * h_pad + h_pad * target_size) * w_bytes
    cost = pl.CostEstimate(
        flops=2 * m * (embed_dim * h_pad + h_pad * target_size),
        transcendentals=0,
        bytes_accessed=m * embed_dim * in_bytes + weight_bytes
                       + m * target_size * out_bytes,
    )

    out = pl.pallas_call(
        _classifier_kernel,
        out_shape=jax.ShapeDtypeStruct((m, target_size), hidden.dtype),
        grid=grid,
        in_specs=[
            # Activation row tile: lane dim == full embed_dim (no wrapper padding).
            pl.BlockSpec((tm, embed_dim), lambda i: (i, 0)),
            # Weights / biases: constant index map -> VMEM-resident across grid.
            pl.BlockSpec((embed_dim, h_pad), lambda i: (0, 0)),
            pl.BlockSpec((1, h_pad), lambda i: (0, 0)),
            pl.BlockSpec((h_pad, target_size), lambda i: (0, 0)),
            pl.BlockSpec((1, target_size), lambda i: (0, 0)),
        ],
        # Output lane dim == full target_size: no post-kernel slice / extra HBM pass.
        out_specs=pl.BlockSpec((tm, target_size), lambda i: (i, 0)),
        compiler_params=pltpu.CompilerParams(
            dimension_semantics=("parallel",),    # megacore sharding on v7x
            vmem_limit_bytes=vmem_limit,
        ),
        cost_estimate=cost,
    )(x2d, w1, b1, w2, b2)

    return out.reshape(*lead_shape, target_size)


# ---------------------------------------------------------------------------
# Demo / correctness check
# ---------------------------------------------------------------------------
if __name__ == "__main__":
    # Shapes implied by the module: hidden [batch, seq, embed_dim]
    batch, seq = 2, 8
    embed_dim, hidden_dim, target_size = 32, 32, 16

    key = jax.random.PRNGKey(0)
    k_x, k_w1, k_b1, k_w2, k_b2 = jax.random.split(key, 5)

    hidden = jax.random.normal(k_x, (batch, seq, embed_dim), dtype=jnp.float32)

    # PyTorch nn.Linear weight convention: [out_features, in_features]
    w_top = jax.random.normal(k_w1, (hidden_dim, embed_dim), dtype=jnp.float32) * 0.1
    b_top = jax.random.normal(k_b1, (hidden_dim,), dtype=jnp.float32) * 0.1
    w_bottom = jax.random.normal(k_w2, (target_size, hidden_dim), dtype=jnp.float32) * 0.1
    b_bottom = jax.random.normal(k_b2, (target_size,), dtype=jnp.float32) * 0.1

    # One-time parameter prep (transpose + hidden-lane padding hoisted off the call path).
    # For bandwidth-bound production configs pass param_dtype=jnp.bfloat16.
    params = prepare_classifier_params(w_top, b_top, w_bottom, b_bottom)

    logits = classifier_forward(hidden, params)
    logits = jax.block_until_ready(logits)

    # Pure-JAX reference check
    ref = jnp.maximum(hidden @ w_top.T + b_top, 0.0) @ w_bottom.T + b_bottom
    assert logits.shape == (batch, seq, target_size)
    assert jnp.allclose(logits, ref, atol=1e-5, rtol=1e-5)

    print("KERNEL_OK")
</pallas_src>

<mosaic_0001>
module attributes {stable_mosaic.version = 11 : i64} {
  func.func @_classifier_kernel(%arg0: i32, %arg1: memref<16x32xf32, #tpu.memory_space<vmem>>, %arg2: memref<32x128xf32, #tpu.memory_space<vmem>>, %arg3: memref<1x128xf32, #tpu.memory_space<vmem>>, %arg4: memref<128x16xf32, #tpu.memory_space<vmem>>, %arg5: memref<1x16xf32, #tpu.memory_space<vmem>>, %arg6: memref<16x16xf32, #tpu.memory_space<vmem>>) attributes {dimension_semantics = [#tpu.dimension_semantics<parallel>], iteration_bounds = array<i64: 1>, scalar_prefetch = 0 : i64, scratch_operands = 0 : i64, tpu.core_type = #tpu.core_type<tc>, window_params = [{transform_indices = @transform_0, window_bounds = array<i64: 16, 32>}, {pipeline_mode = #tpu.pipeline_mode<synchronous>, transform_indices = @transform_1, window_bounds = array<i64: 32, 128>}, {pipeline_mode = #tpu.pipeline_mode<synchronous>, transform_indices = @transform_2, window_bounds = array<i64: 1, 128>}, {pipeline_mode = #tpu.pipeline_mode<synchronous>, transform_indices = @transform_3, window_bounds = array<i64: 128, 16>}, {pipeline_mode = #tpu.pipeline_mode<synchronous>, transform_indices = @transform_4, window_bounds = array<i64: 1, 16>}, {transform_indices = @transform_5, window_bounds = array<i64: 16, 16>}]} {
    %c0 = arith.constant 0 : index
    %c0_0 = arith.constant 0 : index
    %0 = vector.load %arg2[%c0, %c0_0] : memref<32x128xf32, #tpu.memory_space<vmem>>, vector<32x128xf32>
    %c0_1 = arith.constant 0 : index
    %c0_2 = arith.constant 0 : index
    %1 = vector.load %arg1[%c0_1, %c0_2] : memref<16x32xf32, #tpu.memory_space<vmem>>, vector<16x32xf32>
    %cst = arith.constant dense<0.000000e+00> : vector<16x128xf32>
    %2 = tpu.matmul %1, %0, %cst {dimension_numbers = #tpu.dot_dimension_numbers<[1], [0], [0], [1], [0, 0, 1, 1], [], []>} : vector<16x32xf32>, vector<32x128xf32>, vector<16x128xf32> -> vector<16x128xf32>
    %c0_3 = arith.constant 0 : index
    %c0_4 = arith.constant 0 : index
    %3 = vector.load %arg3[%c0_3, %c0_4] : memref<1x128xf32, #tpu.memory_space<vmem>>, vector<1x128xf32>
    %4 = vector.broadcast %3 : vector<1x128xf32> to vector<16x128xf32>
    %5 = arith.addf %2, %4 : vector<16x128xf32>
    %cst_5 = arith.constant 0.000000e+00 : f32
    %6 = vector.broadcast %cst_5 : f32 to vector<16x128xf32>
    %7 = arith.maximumf %5, %6 : vector<16x128xf32>
    %c0_6 = arith.constant 0 : index
    %c0_7 = arith.constant 0 : index
    %8 = vector.load %arg4[%c0_6, %c0_7] : memref<128x16xf32, #tpu.memory_space<vmem>>, vector<128x16xf32>
    %cst_8 = arith.constant dense<0.000000e+00> : vector<16x16xf32>
    %9 = tpu.matmul %7, %8, %cst_8 {dimension_numbers = #tpu.dot_dimension_numbers<[1], [0], [0], [1], [0, 0, 1, 1], [], []>} : vector<16x128xf32>, vector<128x16xf32>, vector<16x16xf32> -> vector<16x16xf32>
    %c0_9 = arith.constant 0 : index
    %c0_10 = arith.constant 0 : index
    %10 = vector.load %arg5[%c0_9, %c0_10] : memref<1x16xf32, #tpu.memory_space<vmem>>, vector<1x16xf32>
    %11 = vector.broadcast %10 : vector<1x16xf32> to vector<16x16xf32>
    %12 = arith.addf %9, %11 : vector<16x16xf32>
    %c0_11 = arith.constant 0 : index
    %c0_12 = arith.constant 0 : index
    %13 = vector.load %arg6[%c0_11, %c0_12] : memref<16x16xf32, #tpu.memory_space<vmem>>, vector<16x16xf32>
    tpu.vector_store %arg6[%c0_11, %c0_12], %12 {strides = array<i32>} : memref<16x16xf32, #tpu.memory_space<vmem>>, vector<16x16xf32>,
    return
  }
  func.func @transform_0(%arg0: i32) -> (i32, i32) {
    %c0_i32 = arith.constant 0 : i32
    %c0_i32_0 = arith.constant 0 : i32
    return %arg0, %c0_i32 : i32, i32
  }
  func.func @transform_1(%arg0: i32) -> (i32, i32) {
    %c0_i32 = arith.constant 0 : i32
    %c0_i32_0 = arith.constant 0 : i32
    %c0_i32_1 = arith.constant 0 : i32
    return %c0_i32, %c0_i32_0 : i32, i32
  }
  func.func @transform_2(%arg0: i32) -> (i32, i32) {
    %c0_i32 = arith.constant 0 : i32
    %c0_i32_0 = arith.constant 0 : i32
    %c0_i32_1 = arith.constant 0 : i32
    return %c0_i32, %c0_i32_0 : i32, i32
  }
  func.func @transform_3(%arg0: i32) -> (i32, i32) {
    %c0_i32 = arith.constant 0 : i32
    %c0_i32_0 = arith.constant 0 : i32
    %c0_i32_1 = arith.constant 0 : i32
    return %c0_i32, %c0_i32_0 : i32, i32
  }
  func.func @transform_4(%arg0: i32) -> (i32, i32) {
    %c0_i32 = arith.constant 0 : i32
    %c0_i32_0 = arith.constant 0 : i32
    %c0_i32_1 = arith.constant 0 : i32
    return %c0_i32, %c0_i32_0 : i32, i32
  }
  func.func @transform_5(%arg0: i32) -> (i32, i32) {
    %c0_i32 = arith.constant 0 : i32
    %c0_i32_0 = arith.constant 0 : i32
    return %arg0, %c0_i32 : i32, i32
  }
}

</mosaic_0001>

<llo_original>
// kernel: tpu_custom_call.1
$region0: #{tpu_custom_call.1}
  #allocation0 [shape = 'u32[]', space=smem, size = 0x4, offset = 0x4, fixed_abs, tag = 'smem constant byte address 0x4 - core index']
  #allocation1 [shape = 'u32[144,128]{1,0:T(1,128)}', space=vmem, size = 0x12000, scoped, tag = 'internal scratch']
  %s0 = inlined_call_operand.vmem [shape: f32[16,32], index: 0, kind: input, shape index: {}]
  %s1 = inlined_call_operand.vmem [shape: f32[32,128], index: 1, kind: input, shape index: {}]
  %s2 = inlined_call_operand.vmem [shape: f32[1,128], index: 2, kind: input, shape index: {}]
  %s3 = inlined_call_operand.vmem [shape: f32[128,16], index: 3, kind: input, shape index: {}]
  %s4 = inlined_call_operand.vmem [shape: f32[1,16], index: 4, kind: input, shape index: {}]
  %s5 = inlined_call_operand.hbm [shape: f32[16,16], index: 5, kind: output, shape index: {}]
  %s6 = sld [smem:[#allocation0]]
  $region30: #{tpu_custom_call.1} parent=0
    _
  %s8 = ssub.s32 1, %s6
  %s9 = scalar_select 0, %s8, %s6
  $region1: #{tpu_custom_call.1} parent=0
    #allocation2 [shape = 'u8[8192]{0}', space=vmem, size = 0x2000, scoped, tag = 'output window, operand 0, single buffered']
    #allocation3 [shape = 's32[1]{0}', space=sflag, size = 0x4, scoped, tag = 'scoped memory for tpu_custom_call.1']
    %10 = vsyncpa [#allocation3], 0
    // Predicated region
    $region2: #{tpu_custom_call.1} parent=1 // pred_check
      _
    $region3: #{tpu_custom_call.1} parent=1 // pred_check_branch
      %12 = sbr.rel (0) target = $region5
    $region4: #{tpu_custom_call.1} parent=1 // pred_region
      _
    $region5: #{tpu_custom_call.1} parent=1 // pred_fallthru
      _
    // Predicated region
    $region6: #{tpu_custom_call.1} parent=1 // pred_check
      _
    $region7: #{tpu_custom_call.1} parent=1 // pred_check_branch
      %14 = sbr.rel (0) target = $region9
    $region8: #{tpu_custom_call.1} parent=1 // pred_region
      _
    $region9: #{tpu_custom_call.1} parent=1 // pred_fallthru
      _
    // Predicated region
    $region10: #{tpu_custom_call.1} parent=1 // pred_check
      _
    $region11: #{tpu_custom_call.1} parent=1 // pred_check_branch
      %16 = sbr.rel (0) target = $region13
    $region12: #{tpu_custom_call.1} parent=1 // pred_region
      _
    $region13: #{tpu_custom_call.1} parent=1 // pred_fallthru
      _
    // Predicated region
    $region14: #{tpu_custom_call.1} parent=1 // pred_check
      _
    $region15: #{tpu_custom_call.1} parent=1 // pred_check_branch
      %18 = sbr.rel (0) target = $region17
    $region16: #{tpu_custom_call.1} parent=1 // pred_region
      _
    $region17: #{tpu_custom_call.1} parent=1 // pred_fallthru
      _
    // Predicated region
    $region18: #{tpu_custom_call.1} parent=1 // pred_check
      _
    $region19: #{tpu_custom_call.1} parent=1 // pred_check_branch
      %20 = sbr.rel (0) target = $region21
    $region20: #{tpu_custom_call.1} parent=1 // pred_region
      _
    $region21: #{tpu_custom_call.1} parent=1 // pred_fallthru
      _
    %v21 = vld [vmem:[%s1] sm:$0xff]
    %v22 = vld [vmem:[%s1 + $0x8] sm:$0xff]
    %v23 = vld [vmem:[%s1 + $0x10] sm:$0xff]
    %v24 = vld [vmem:[%s1 + $0x18] sm:$0xff]
    %v25 = vld [vmem:[%s0] sm:$0xff]
    %v26 = vld [vmem:[%s0 + $0x8] sm:$0xff]
    %v27 = vld [vmem:[%s2] sm:$0x1]
    %v29 = vlaneseq
    %v30 = vshrl.u32 %v29, 7
    %v31 = vsub.s32 0, %v30
    %v32 = vrot.slane %v27, %v31
    %vm34 = vcmask 261120
    %v36 = vsel %vm34, %v25, 0
    %v39 = vsel %vm34, %v26, 0
    %41 = vmatprep.subr.mxu0 0.0
    %42 = vmatpush1.msra.mxu0 0.0
    %43 = vmatprep.subr.mxu0 0.0
    %44 = vmatpush1.msra.mxu0 0.0
    %45 = vmatprep.subr.mxu0 0.0
    %46 = vmatpush1.msra.mxu0 0.0
    %47 = vmatprep.subr.mxu0 0.0
    %48 = vmatpush1.msra.mxu0 0.0
    %49 = vmatprep.subr.mxu0 0.0
    %50 = vmatpush1.msra.mxu0 0.0
    %51 = vmatprep.subr.mxu0 0.0
    %52 = vmatpush1.msra.mxu0 0.0
    %53 = vmatprep.subr.mxu0 0.0
    %54 = vmatpush1.msra.mxu0 0.0
    %55 = vmatprep.subr.mxu0 0.0
    %56 = vmatpush1.msra.mxu0 0.0
    %57 = vmatprep.subr.mxu0 0.0
    %58 = vmatpush1.msra.mxu0 0.0
    %59 = vmatprep.subr.mxu0 0.0
    %60 = vmatpush1.msra.mxu0 0.0
    %61 = vmatprep.subr.mxu0 0.0
    %62 = vmatpush1.msra.mxu0 0.0
    %63 = vmatprep.subr.mxu0 0.0
    %64 = vmatpush1.msra.mxu0 0.0
    %65 = vmatprep.subr.mxu0 0.0
    %66 = vmatpush1.msra.mxu0 %v24
    %67 = vmatprep.subr.mxu0 0.0
    %68 = vmatpush1.msra.mxu0 %v23
    %69 = vmatprep.subr.mxu0 0.0
    %70 = vmatpush1.msra.mxu0 %v22
    %71 = vmatprep.subr.mxu0 0.0
    %72 = vmatpush1.msra.mxu0 %v21
    %73 = vmatprep.subr.mxu0 0.0
    %74 = vmatpush2.msra.mxu0 0.0
    %75 = vmatprep.subr.mxu0 0.0
    %76 = vmatpush2.msra.mxu0 0.0
    %77 = vmatprep.subr.mxu0 0.0
    %78 = vmatpush2.msra.mxu0 0.0
    %79 = vmatprep.subr.mxu0 0.0
    %80 = vmatpush2.msra.mxu0 0.0
    %81 = vmatprep.subr.mxu0 0.0
    %82 = vmatpush2.msra.mxu0 0.0
    %83 = vmatprep.subr.mxu0 0.0
    %84 = vmatpush2.msra.mxu0 0.0
    %85 = vmatprep.subr.mxu0 0.0
    %86 = vmatpush2.msra.mxu0 0.0
    %87 = vmatprep.subr.mxu0 0.0
    %88 = vmatpush2.msra.mxu0 0.0
    %89 = vmatprep.subr.mxu0 0.0
    %90 = vmatpush2.msra.mxu0 0.0
    %91 = vmatprep.subr.mxu0 0.0
    %92 = vmatpush2.msra.mxu0 0.0
    %93 = vmatprep.subr.mxu0 0.0
    %94 = vmatpush2.msra.mxu0 0.0
    %95 = vmatprep.subr.mxu0 0.0
    %96 = vmatpush2.msra.mxu0 0.0
    %97 = vmatprep.subr.mxu0 0.0
    %98 = vmatpush2.msra.mxu0 0.0
    %99 = vmatprep.subr.mxu0 0.0
    %100 = vmatpush2.msra.mxu0 0.0
    %101 = vmatprep.subr.mxu0 0.0
    %102 = vmatpush2.msra.mxu0 0.0
    %103 = vmatprep.subr.mxu0 0.0
    %104 = vmatpush2.msra.mxu0 0.0
    %105 = vmatprep.mubr.f32.mxu0 0.0
    %106 = vmatmul.mubr.f32.gmra.mxu0 %v36
    %v107 = vpop.f32.mrf.mxu0
    %v108 = vadd.f32 %v32, %v107
    %v109 = vpop.f32.mrf.mxu0
    %110 = vmatprep.mubr.f32.mxu0 0.0
    %111 = vmatmul.mubr.f32.gmra.mxu0 %v39
    %v112 = vpop.f32.mrf.mxu0
    %v113 = vadd.f32 %v32, %v112
    %v114 = vpop.f32.mrf.mxu0
    %115 = vdwg.mxu0
    %v116 = vmax.f32 %v108, 0.0
    %v117 = vmax.f32 %v113, 0.0
    %v118 = vld [vmem:[%s3] sm:$0xff]
    %v119 = vld [vmem:[%s3 + $0x8] sm:$0xff]
    %v120 = vld [vmem:[%s3 + $0x10] sm:$0xff]
    %v121 = vld [vmem:[%s3 + $0x18] sm:$0xff]
    %v122 = vld [vmem:[%s3 + $0x20] sm:$0xff]
    %v123 = vld [vmem:[%s3 + $0x28] sm:$0xff]
    %v124 = vld [vmem:[%s3 + $0x30] sm:$0xff]
    %v125 = vld [vmem:[%s3 + $0x38] sm:$0xff]
    %v126 = vld [vmem:[%s3 + $0x40] sm:$0xff]
    %v127 = vld [vmem:[%s3 + $0x48] sm:$0xff]
    %v128 = vld [vmem:[%s3 + $0x50] sm:$0xff]
    %v129 = vld [vmem:[%s3 + $0x58] sm:$0xff]
    %v130 = vld [vmem:[%s3 + $0x60] sm:$0xff]
    %v131 = vld [vmem:[%s3 + $0x68] sm:$0xff]
    %v132 = vld [vmem:[%s3 + $0x70] sm:$0xff]
    %v133 = vld [vmem:[%s3 + $0x78] sm:$0xff]
    %v134 = vld [vmem:[%s4] sm:$0x1]
    %v136 = vlaneseq
    %v137 = vshrl.u32 %v136, 7
    %v138 = vsub.s32 0, %v137
    %v139 = vrot.slane %v134, %v138
    %141 = vmatprep.subr.mxu0 0.0
    %142 = vmatpush1.msra.mxu0 %v133
    %143 = vmatprep.subr.mxu0 0.0
    %144 = vmatpush1.msra.mxu0 %v132
    %145 = vmatprep.subr.mxu0 0.0
    %146 = vmatpush1.msra.mxu0 %v131
    %147 = vmatprep.subr.mxu0 0.0
    %148 = vmatpush1.msra.mxu0 %v130
    %149 = vmatprep.subr.mxu0 0.0
    %150 = vmatpush1.msra.mxu0 %v129
    %151 = vmatprep.subr.mxu0 0.0
    %152 = vmatpush1.msra.mxu0 %v128
    %153 = vmatprep.subr.mxu0 0.0
    %154 = vmatpush1.msra.mxu0 %v127
    %155 = vmatprep.subr.mxu0 0.0
    %156 = vmatpush1.msra.mxu0 %v126
    %157 = vmatprep.subr.mxu0 0.0
    %158 = vmatpush1.msra.mxu0 %v125
    %159 = vmatprep.subr.mxu0 0.0
    %160 = vmatpush1.msra.mxu0 %v124
    %161 = vmatprep.subr.mxu0 0.0
    %162 = vmatpush1.msra.mxu0 %v123
    %163 = vmatprep.subr.mxu0 0.0
    %164 = vmatpush1.msra.mxu0 %v122
    %165 = vmatprep.subr.mxu0 0.0
    %166 = vmatpush1.msra.mxu0 %v121
    %167 = vmatprep.subr.mxu0 0.0
    %168 = vmatpush1.msra.mxu0 %v120
    %169 = vmatprep.subr.mxu0 0.0
    %170 = vmatpush1.msra.mxu0 %v119
    %171 = vmatprep.subr.mxu0 0.0
    %172 = vmatpush1.msra.mxu0 %v118
    %173 = vmatprep.subr.mxu0 0.0
    %174 = vmatpush2.msra.mxu0 0.0
    %175 = vmatprep.subr.mxu0 0.0
    %176 = vmatpush2.msra.mxu0 0.0
    %177 = vmatprep.subr.mxu0 0.0
    %178 = vmatpush2.msra.mxu0 0.0
    %179 = vmatprep.subr.mxu0 0.0
    %180 = vmatpush2.msra.mxu0 0.0
    %181 = vmatprep.subr.mxu0 0.0
    %182 = vmatpush2.msra.mxu0 0.0
    %183 = vmatprep.subr.mxu0 0.0
    %184 = vmatpush2.msra.mxu0 0.0
    %185 = vmatprep.subr.mxu0 0.0
    %186 = vmatpush2.msra.mxu0 0.0
    %187 = vmatprep.subr.mxu0 0.0
    %188 = vmatpush2.msra.mxu0 0.0
    %189 = vmatprep.subr.mxu0 0.0
    %190 = vmatpush2.msra.mxu0 0.0
    %191 = vmatprep.subr.mxu0 0.0
    %192 = vmatpush2.msra.mxu0 0.0
    %193 = vmatprep.subr.mxu0 0.0
    %194 = vmatpush2.msra.mxu0 0.0
    %195 = vmatprep.subr.mxu0 0.0
    %196 = vmatpush2.msra.mxu0 0.0
    %197 = vmatprep.subr.mxu0 0.0
    %198 = vmatpush2.msra.mxu0 0.0
    %199 = vmatprep.subr.mxu0 0.0
    %200 = vmatpush2.msra.mxu0 0.0
    %201 = vmatprep.subr.mxu0 0.0
    %202 = vmatpush2.msra.mxu0 0.0
    %203 = vmatprep.subr.mxu0 0.0
    %204 = vmatpush2.msra.mxu0 0.0
    %205 = vmatprep.mubr.f32.mxu0 0.0
    %206 = vmatmul.mubr.f32.gmra.mxu0 %v116
    %v207 = vpop.f32.mrf.mxu0
    %v208 = vadd.f32 %v139, %v207
    %v209 = vpop.f32.mrf.mxu0
    %210 = vmatprep.mubr.f32.mxu0 0.0
    %211 = vmatmul.mubr.f32.gmra.mxu0 %v117
    %v212 = vpop.f32.mrf.mxu0
    %v213 = vadd.f32 %v139, %v212
    %v214 = vpop.f32.mrf.mxu0
    %215 = vdwg.mxu0
    %vm216 = vcmask 130048
    %217 = vst.msk [vmem:[#allocation2] sm:$0xff] %vm216, %v208
    %218 = vst.msk [vmem:[#allocation2 + $0x8] sm:$0xff] %vm216, %v213
    // Predicated region
    $region22: #{tpu_custom_call.1} parent=1 // pred_check
      _
    $region23: #{tpu_custom_call.1} parent=1 // pred_check_branch
      %220 = sbr.rel (0) target = $region25
    $region24: #{tpu_custom_call.1} parent=1 // pred_region
      %s222 = ssub.s32 256, 256
      %223 = vsyncadd [#allocation3], %s222
      %s224 = sshll.u32 [#allocation2], 4
      %s225 = int_to_ptr.vmem [resolvable:$true] %s224
      %230 = dma.vmem_to_hbm [thread:$0]  %s225, 256, %s5, [#allocation3], 128, 128, 8
    $region25: #{tpu_custom_call.1} parent=1 // pred_fallthru
      _
    // Predicated region
    $region26: #{tpu_custom_call.1} parent=1 // pred_check
      _
    $region27: #{tpu_custom_call.1} parent=1 // pred_check_branch
      %232 = sbr.rel (0) target = $region29
    $region28: #{tpu_custom_call.1} parent=1 // pred_region
      %233 = dma.done [#allocation3], 256
    $region29: #{tpu_custom_call.1} parent=1 // pred_fallthru
      _
    %234 = vsyncpa [#allocation3], 1

</llo_original>
